<compile_context>
chip_gen: v7x
topology: tpu7x:2x2x1
jax: 0.10.0
libtpu: 0.0.40
codegen_flags: <defaults>
</compile_context>

<pallas_src>
from copy import copy

import numpy as np
import jax
import jax.numpy as jnp
from jax.experimental import pallas as pl
from jax.experimental.pallas import tpu as pltpu


def _round_up(a, b):
    return (a + b - 1) // b * b


# ------------------------- Pallas kernel (hot path) -------------------------

def _fused_ensembles_kernel(x_ref, w1_ref, w2_ref, b2_ref, o_ref):
    # x_ref : (TN, n_in+1)   batch tile, last column is ones (folds b1 into W1)
    # w1_ref: (n_in+1, M*H)  every member's first-layer weights lane-stacked;
    #                        last input row holds the flattened b1
    # w2_ref: (M*H, Mpad)    block-diagonal second-layer weights, lane-padded to 128
    # b2_ref: (1, Mpad)
    # o_ref : (TN, Mpad)     lane-dense output slab (sliced back in the wrapper)
    h = jnp.maximum(
        jnp.dot(x_ref[...], w1_ref[...], preferred_element_type=jnp.float32), 0.0)
    logits = jnp.dot(h, w2_ref[...], preferred_element_type=jnp.float32) + b2_ref[...]
    # sigmoid via exp + reciprocal: both land on the (otherwise idle) EUP slot.
    t = jnp.exp(-logits)
    o_ref[...] = pl.reciprocal(1.0 + t).astype(o_ref.dtype)


@jax.jit
def _ensembles_batched_forward(x, w1_aug, w2_bd, b2_pad):
    """One pallas_call for ALL members of ALL ensembles sharing this n_in.

    Returns (N, Mpad) f32; column j is member j's sigmoid output
    (member-major: j = ensemble_slot * n_models + member)."""
    N, _ = x.shape
    n_in_aug, MH = w1_aug.shape
    Mpad = w2_bd.shape[1]

    x = x.astype(jnp.float32)
    # Fold b1 into W1_aug by appending a ones column to x.
    x_aug = jnp.concatenate([x, jnp.ones((N, 1), jnp.float32)], axis=1)

    # One "parallel" grid axis over batch rows; weights stay resident (index 0,0).
    tile_n = min(512, _round_up(N, 8))          # <=512 rows: well under v7x VMEM
    n_pad = _round_up(N, tile_n)
    if n_pad != N:
        x_aug = jnp.pad(x_aug, ((0, n_pad - N), (0, 0)))

    out = pl.pallas_call(
        _fused_ensembles_kernel,
        out_shape=jax.ShapeDtypeStruct((n_pad, Mpad), jnp.float32),
        grid_spec=pltpu.PrefetchScalarGridSpec(
            num_scalar_prefetch=0,
            grid=(n_pad // tile_n,),
            in_specs=[
                pl.BlockSpec((tile_n, n_in_aug), lambda i: (i, 0)),
                pl.BlockSpec((n_in_aug, MH), lambda i: (0, 0)),
                pl.BlockSpec((MH, Mpad), lambda i: (0, 0)),
                pl.BlockSpec((1, Mpad), lambda i: (0, 0)),
            ],
            out_specs=pl.BlockSpec((tile_n, Mpad), lambda i: (i, 0)),
        ),
        compiler_params=pltpu.CompilerParams(
            dimension_semantics=("parallel",)),
    )(x_aug, w1_aug, w2_bd, b2_pad)
    return out[:N]


# ----------------------------- Ensembles (glue) -----------------------------

class EnsemblesJax:
    """JAX/Pallas port of `Ensembles`: a dict of per-(action, obj, grasp)
    ensembles, each holding n_models stacked MLP parameter sets.  All ensembles
    that share an input width are evaluated by a single fused Pallas kernel."""

    ACTIONS = ['pick', 'move_contact-poke', 'move_contact-push_pull',
               'move_holding']

    def __init__(self, base_args, n_models, objects, wi, hidden=32, seed=0):
        self.all_n_in = copy(base_args['n_in'])       # dict: action -> n_in
        self.base_args = copy(base_args)
        self.n_models = n_models
        self.objects = objects
        self.hidden = hidden
        wi = 7 if wi is None else wi
        self.weight_init_sds = {'move_contact-push_pull': wi}
        self._seed = seed
        self.reset()

    # -- synthetic per-ensemble init (base_model class not given in the spec) --
    def _init_member_params(self, key, n_in, winit_sd):
        k1, k2, k3, k4 = jax.random.split(key, 4)
        scale = 1.0 / float(winit_sd)
        w1 = scale * jax.random.normal(k1, (self.n_models, n_in, self.hidden),
                                       jnp.float32)
        b1 = scale * jax.random.normal(k2, (self.n_models, 1, self.hidden),
                                       jnp.float32)
        w2 = scale * jax.random.normal(k3, (self.n_models, self.hidden, 1),
                                       jnp.float32)
        b2 = scale * jax.random.normal(k4, (self.n_models, 1, 1), jnp.float32)
        return dict(w1=w1, b1=b1, w2=w2, b2=b2)

    def reset(self):
        self.ensembles = {}
        key = jax.random.PRNGKey(self._seed)
        idx = 0
        order = []
        for action in self.ACTIONS:
            self.ensembles[action] = {}
            for obj in self.objects:
                self.ensembles[action][obj] = {}
                grasps = ['p1', 'n1'] if 'move_contact' in action else ['None']
                for grasp in grasps:
                    n_in = self.all_n_in[action]
                    winit_sd = self.weight_init_sds.get(action, 7)
                    sub = jax.random.fold_in(key, idx)
                    idx += 1
                    self.ensembles[action][obj][grasp] = \
                        self._init_member_params(sub, n_in, winit_sd)
                    order.append((action, obj, grasp))
        self._pack_groups(order)

    def _pack_groups(self, order):
        """Pack every ensemble sharing an n_in into one fused parameter set."""
        H = self.hidden
        groups = {}
        for key in order:
            action, _, _ = key
            groups.setdefault(self.all_n_in[action], []).append(key)

        self.packed = {}
        for n_in, keys in groups.items():
            M = len(keys) * self.n_models                 # total members in group
            Mpad = _round_up(M, 128)                      # lane-dense output width

            w1 = jnp.concatenate([self.ensembles[a][o][g]['w1'] for a, o, g in keys], 0)
            b1 = jnp.concatenate([self.ensembles[a][o][g]['b1'] for a, o, g in keys], 0)
            w2 = jnp.concatenate([self.ensembles[a][o][g]['w2'] for a, o, g in keys], 0)
            b2 = jnp.concatenate([self.ensembles[a][o][g]['b2'] for a, o, g in keys], 0)

            # Layer 1: lane-stacked, with b1 folded in as an extra input row.
            w1f = jnp.transpose(w1, (1, 0, 2)).reshape(n_in, M * H)
            b1f = b1.reshape(1, M * H)
            w1_aug = jnp.concatenate([w1f, b1f], axis=0)          # (n_in+1, M*H)

            # Layer 2: block-diagonal MXU weight, padded to a 128-lane width.
            blocks = w2[:, :, 0]                                   # (M, H)
            w2_bd = (blocks[:, :, None] *
                     jnp.eye(M, dtype=jnp.float32)[:, None, :]).reshape(M * H, M)
            w2_bd = jnp.pad(w2_bd, ((0, 0), (0, Mpad - M)))
            b2f = jnp.pad(b2.reshape(1, M), ((0, 0), (0, Mpad - M)))

            self.packed[n_in] = dict(
                w1_aug=w1_aug, w2_bd=w2_bd, b2=b2f,
                slots={k: i for i, k in enumerate(keys)}, M=M, Mpad=Mpad)

    # --------------------------- forward dispatch ---------------------------
    def forward_many(self, x, keys):
        """Evaluate many (action, obj, grasp) ensembles on x.  All ensembles
        sharing an n_in are computed by ONE pallas_call (amortizes launch/DMA
        overhead).  Returns dict key -> (n_models, N, 1)."""
        by_group = {}
        for key in keys:
            action, _, _ = key
            by_group.setdefault(self.all_n_in[action], []).append(key)

        out = {}
        for n_in, group_keys in by_group.items():
            pack = self.packed[n_in]
            full = _ensembles_batched_forward(
                x, pack['w1_aug'], pack['w2_bd'], pack['b2'])   # (N, Mpad)
            for key in group_keys:
                slot = pack['slots'][key]
                cols = full[:, slot * self.n_models:(slot + 1) * self.n_models]
                # (N, n_models) -> (n_models, N, 1) to match torch cat/unsqueeze.
                out[key] = jnp.transpose(cols, (1, 0))[:, :, None]
        return out

    def forward(self, x, action, obj, grasp='None'):
        # Original torch forward is `self.ensembles[action][obj].forward()`
        # (drops x and grasp); we implement the intended dispatch.
        return self.forward_many(x, [(action, obj, grasp)])[(action, obj, grasp)]


# ------------------------------- reference ----------------------------------

def ensemble_forward_ref(x, w1, b1, w2, b2):
    h = jnp.maximum(
        jnp.einsum('ni,mih->mnh', x, w1,
                   precision=jax.lax.Precision.HIGHEST) + b1, 0.0)
    return jax.nn.sigmoid(
        jnp.einsum('mnh,mho->mno', h, w2,
                   precision=jax.lax.Precision.HIGHEST) + b2)


# --------------------------------- driver -----------------------------------

if __name__ == "__main__":
    N = 8              # batch
    N_IN = 32          # base model input features (same for every action here)
    HIDDEN = 32
    N_MODELS = 4
    objects = ['block', 'cylinder']

    base_args = {
        'n_in': {a: N_IN for a in EnsemblesJax.ACTIONS},
        'winit_sd': 7,
    }

    model = EnsemblesJax(base_args, N_MODELS, objects, wi=5,
                         hidden=HIDDEN, seed=0)

    key = jax.random.PRNGKey(0)
    x = jax.random.normal(key, (N, N_IN), jnp.float32)

    # All 12 (action, obj, grasp) ensembles evaluated in ONE pallas_call.
    all_keys = []
    for action in EnsemblesJax.ACTIONS:
        for obj in objects:
            grasps = ['p1', 'n1'] if 'move_contact' in action else ['None']
            for grasp in grasps:
                all_keys.append((action, obj, grasp))
    outs = model.forward_many(x, all_keys)
    jax.block_until_ready(outs)

    # Single-ensemble dispatch (same fused kernel underneath).
    out_pick = model.forward(x, 'pick', 'block', 'None')
    out_push = model.forward(x, 'move_contact-push_pull', 'cylinder', 'p1')
    jax.block_until_ready(out_pick)
    jax.block_until_ready(out_push)

    # correctness checks against pure-JAX reference
    def check(out, action, obj, grasp):
        p = model.ensembles[action][obj][grasp]
        ref = ensemble_forward_ref(x, p['w1'], p['b1'], p['w2'], p['b2'])
        np.testing.assert_allclose(np.asarray(out), np.asarray(ref),
                                   rtol=1e-5, atol=1e-5)
        assert out.shape == (N_MODELS, N, 1)

    check(out_pick, 'pick', 'block', 'None')
    check(out_push, 'move_contact-push_pull', 'cylinder', 'p1')
    check(outs[('move_holding', 'cylinder', 'None')],
          'move_holding', 'cylinder', 'None')
    check(outs[('move_contact-poke', 'block', 'n1')],
          'move_contact-poke', 'block', 'n1')

    print("KERNEL_OK")
</pallas_src>

<mosaic_0001>
module attributes {stable_mosaic.version = 11 : i64} {
  func.func @_fused_ensembles_kernel(%arg0: i32, %arg1: memref<8x33xf32, #tpu.memory_space<vmem>>, %arg2: memref<33x1536xf32, #tpu.memory_space<vmem>>, %arg3: memref<1536x128xf32, #tpu.memory_space<vmem>>, %arg4: memref<1x128xf32, #tpu.memory_space<vmem>>, %arg5: memref<8x128xf32, #tpu.memory_space<vmem>>) attributes {dimension_semantics = [#tpu.dimension_semantics<parallel>], iteration_bounds = array<i64: 1>, scalar_prefetch = 0 : i64, scratch_operands = 0 : i64, tpu.core_type = #tpu.core_type<tc>, window_params = [{transform_indices = @transform_0, window_bounds = array<i64: 8, 33>}, {pipeline_mode = #tpu.pipeline_mode<synchronous>, transform_indices = @transform_1, window_bounds = array<i64: 33, 1536>}, {pipeline_mode = #tpu.pipeline_mode<synchronous>, transform_indices = @transform_2, window_bounds = array<i64: 1536, 128>}, {pipeline_mode = #tpu.pipeline_mode<synchronous>, transform_indices = @transform_3, window_bounds = array<i64: 1, 128>}, {transform_indices = @transform_4, window_bounds = array<i64: 8, 128>}]} {
    %c0 = arith.constant 0 : index
    %c0_0 = arith.constant 0 : index
    %0 = vector.load %arg1[%c0, %c0_0] : memref<8x33xf32, #tpu.memory_space<vmem>>, vector<8x33xf32>
    %c0_1 = arith.constant 0 : index
    %c0_2 = arith.constant 0 : index
    %1 = vector.load %arg2[%c0_1, %c0_2] : memref<33x1536xf32, #tpu.memory_space<vmem>>, vector<33x1536xf32>
    %cst = arith.constant dense<0.000000e+00> : vector<8x1536xf32>
    %2 = tpu.matmul %0, %1, %cst {dimension_numbers = #tpu.dot_dimension_numbers<[1], [0], [0], [1], [0, 0, 1, 1], [], []>} : vector<8x33xf32>, vector<33x1536xf32>, vector<8x1536xf32> -> vector<8x1536xf32>
    %cst_3 = arith.constant 0.000000e+00 : f32
    %3 = vector.broadcast %cst_3 : f32 to vector<8x1536xf32>
    %4 = arith.maximumf %2, %3 : vector<8x1536xf32>
    %c0_4 = arith.constant 0 : index
    %c0_5 = arith.constant 0 : index
    %5 = vector.load %arg3[%c0_4, %c0_5] : memref<1536x128xf32, #tpu.memory_space<vmem>>, vector<1536x128xf32>
    %cst_6 = arith.constant dense<0.000000e+00> : vector<8x128xf32>
    %6 = tpu.matmul %4, %5, %cst_6 {dimension_numbers = #tpu.dot_dimension_numbers<[1], [0], [0], [1], [0, 0, 1, 1], [], []>} : vector<8x1536xf32>, vector<1536x128xf32>, vector<8x128xf32> -> vector<8x128xf32>
    %c0_7 = arith.constant 0 : index
    %c0_8 = arith.constant 0 : index
    %7 = vector.load %arg4[%c0_7, %c0_8] : memref<1x128xf32, #tpu.memory_space<vmem>>, vector<1x128xf32>
    %8 = vector.broadcast %7 : vector<1x128xf32> to vector<8x128xf32>
    %9 = arith.addf %6, %8 : vector<8x128xf32>
    %cst_9 = arith.constant 0.000000e+00 : f32
    %10 = vector.broadcast %cst_9 : f32 to vector<8x128xf32>
    %11 = arith.subf %10, %9 : vector<8x128xf32>
    %12 = math.exp %11 : vector<8x128xf32>
    %cst_10 = arith.constant 1.000000e+00 : f32
    %13 = vector.broadcast %cst_10 : f32 to vector<8x128xf32>
    %14 = arith.addf %13, %12 : vector<8x128xf32>
    %15 = tpu.reciprocal %14 : vector<8x128xf32> -> vector<8x128xf32>
    %c0_11 = arith.constant 0 : index
    %c0_12 = arith.constant 0 : index
    %16 = vector.load %arg5[%c0_11, %c0_12] : memref<8x128xf32, #tpu.memory_space<vmem>>, vector<8x128xf32>
    tpu.vector_store %arg5[%c0_11, %c0_12], %15 {strides = array<i32>} : memref<8x128xf32, #tpu.memory_space<vmem>>, vector<8x128xf32>,
    return
  }
  func.func @transform_0(%arg0: i32) -> (i32, i32) {
    %c0_i32 = arith.constant 0 : i32
    %c0_i32_0 = arith.constant 0 : i32
    return %arg0, %c0_i32 : i32, i32
  }
  func.func @transform_1(%arg0: i32) -> (i32, i32) {
    %c0_i32 = arith.constant 0 : i32
    %c0_i32_0 = arith.constant 0 : i32
    %c0_i32_1 = arith.constant 0 : i32
    return %c0_i32, %c0_i32_0 : i32, i32
  }
  func.func @transform_2(%arg0: i32) -> (i32, i32) {
    %c0_i32 = arith.constant 0 : i32
    %c0_i32_0 = arith.constant 0 : i32
    %c0_i32_1 = arith.constant 0 : i32
    return %c0_i32, %c0_i32_0 : i32, i32
  }
  func.func @transform_3(%arg0: i32) -> (i32, i32) {
    %c0_i32 = arith.constant 0 : i32
    %c0_i32_0 = arith.constant 0 : i32
    %c0_i32_1 = arith.constant 0 : i32
    return %c0_i32, %c0_i32_0 : i32, i32
  }
  func.func @transform_4(%arg0: i32) -> (i32, i32) {
    %c0_i32 = arith.constant 0 : i32
    %c0_i32_0 = arith.constant 0 : i32
    return %arg0, %c0_i32 : i32, i32
  }
}

</mosaic_0001>

<llo_original>
// kernel: _ensembles_batched_forward.1
$region0: #{_ensembles_batched_forward.1}
  #allocation0 [shape = 'u32[]', space=smem, size = 0x4, offset = 0x4, fixed_abs, tag = 'smem constant byte address 0x4 - core index']
  #allocation1 [shape = 'u32[144,128]{1,0:T(1,128)}', space=vmem, size = 0x12000, scoped, tag = 'internal scratch']
  %s0 = inlined_call_operand.vmem [shape: f32[8,33], index: 0, kind: input, shape index: {}]
  %s1 = inlined_call_operand.hbm [shape: f32[33,1536], index: 1, kind: input, shape index: {}]
  %s2 = inlined_call_operand.hbm [shape: f32[1536,128], index: 2, kind: input, shape index: {}]
  %s3 = inlined_call_operand.vmem [shape: f32[1,128], index: 3, kind: input, shape index: {}]
  %s4 = inlined_call_operand.hbm [shape: f32[8,128], index: 4, kind: output, shape index: {}]
  %s5 = sld [smem:[#allocation0]]
  $region34: #{_ensembles_batched_forward.1} parent=0
    _
  %s7 = ssub.s32 1, %s5
  %s8 = scalar_select 0, %s7, %s5
  $region1: #{_ensembles_batched_forward.1} parent=0
    #allocation2 [shape = 'u8[245760]{0}', space=vmem, size = 0x3c000, scoped, tag = 'input window, operand 1, single buffered']
    #allocation3 [shape = 's32[1]{0}', space=sflag, size = 0x4, scoped, tag = 'scoped memory for _ensembles_batched_forward.1']
    #allocation4 [shape = 's32[1]{0}', space=sflag, size = 0x4, scoped, tag = 'scoped memory for _ensembles_batched_forward.1']
    #allocation5 [shape = 'u8[786432]{0}', space=vmem, size = 0xc0000, scoped, tag = 'input window, operand 2, single buffered']
    #allocation6 [shape = 's32[1]{0}', space=sflag, size = 0x4, scoped, tag = 'scoped memory for _ensembles_batched_forward.1']
    #allocation7 [shape = 'u8[4096]{0}', space=vmem, size = 0x1000, scoped, tag = 'output window, operand 0, single buffered']
    %9 = vsyncpa [#allocation3], 0
    %10 = vsyncpa [#allocation6], 0
    %11 = vsyncpa [#allocation4], 0
    // Predicated region
    $region2: #{_ensembles_batched_forward.1} parent=1 // pred_check
      _
    $region3: #{_ensembles_batched_forward.1} parent=1 // pred_check_branch
      %13 = sbr.rel (0) target = $region5
    $region4: #{_ensembles_batched_forward.1} parent=1 // pred_region
      _
    $region5: #{_ensembles_batched_forward.1} parent=1 // pred_fallthru
      _
    // Predicated region
    $region6: #{_ensembles_batched_forward.1} parent=1 // pred_check
      _
    $region7: #{_ensembles_batched_forward.1} parent=1 // pred_check_branch
      %15 = sbr.rel (0) target = $region9
    $region8: #{_ensembles_batched_forward.1} parent=1 // pred_region
      %s17 = ssub.s32 7680, 7680
      %18 = vsyncadd [#allocation3], %s17
      %s19 = sshll.u32 [#allocation2], 4
      %s20 = int_to_ptr.vmem [resolvable:$true] %s19
      %25 = dma.hbm_to_vmem [thread:$0]  %s1, 7680, %s20, [#allocation3], 1536, 1536, 96
    $region9: #{_ensembles_batched_forward.1} parent=1 // pred_fallthru
      _
    // Predicated region
    $region10: #{_ensembles_batched_forward.1} parent=1 // pred_check
      _
    $region11: #{_ensembles_batched_forward.1} parent=1 // pred_check_branch
      %27 = sbr.rel (0) target = $region13
    $region12: #{_ensembles_batched_forward.1} parent=1 // pred_region
      %s29 = ssub.s32 24576, 24576
      %30 = vsyncadd [#allocation6], %s29
      %s31 = sshll.u32 [#allocation5], 4
      %s32 = int_to_ptr.vmem [resolvable:$true] %s31
      %37 = dma.hbm_to_vmem [thread:$0]  %s2, 24576, %s32, [#allocation6], 128, 128, 8
    $region13: #{_ensembles_batched_forward.1} parent=1 // pred_fallthru
      _
    // Predicated region
    $region14: #{_ensembles_batched_forward.1} parent=1 // pred_check
      _
    $region15: #{_ensembles_batched_forward.1} parent=1 // pred_check_branch
      %39 = sbr.rel (0) target = $region17
    $region16: #{_ensembles_batched_forward.1} parent=1 // pred_region
      _
    $region17: #{_ensembles_batched_forward.1} parent=1 // pred_fallthru
      _
    // Predicated region
    $region18: #{_ensembles_batched_forward.1} parent=1 // pred_check
      _
    $region19: #{_ensembles_batched_forward.1} parent=1 // pred_check_branch
      %41 = sbr.rel (0) target = $region21
    $region20: #{_ensembles_batched_forward.1} parent=1 // pred_region
      %42 = dma.done [#allocation3], 7680
    $region21: #{_ensembles_batched_forward.1} parent=1 // pred_fallthru
      _
    // Predicated region
    $region22: #{_ensembles_batched_forward.1} parent=1 // pred_check
      _
    $region23: #{_ensembles_batched_forward.1} parent=1 // pred_check_branch
      %44 = sbr.rel (0) target = $region25
    $region24: #{_ensembles_batched_forward.1} parent=1 // pred_region
      %45 = dma.done [#allocation6], 24576
    $region25: #{_ensembles_batched_forward.1} parent=1 // pred_fallthru
      _
    %v46 = vld [vmem:[%s0] sm:$0xff]
    %v47 = vld [vmem:[#allocation2] sm:$0xff]
    %v48 = vld [vmem:[#allocation2 + $0x8] sm:$0xff]
    %v49 = vld [vmem:[#allocation2 + $0x10] sm:$0xff]
    %v50 = vld [vmem:[#allocation2 + $0x18] sm:$0xff]
    %v51 = vld [vmem:[#allocation2 + $0x20] sm:$0xff]
    %v52 = vld [vmem:[#allocation2 + $0x28] sm:$0xff]
    %v53 = vld [vmem:[#allocation2 + $0x30] sm:$0xff]
    %v54 = vld [vmem:[#allocation2 + $0x38] sm:$0xff]
    %v55 = vld [vmem:[#allocation2 + $0x40] sm:$0xff]
    %v56 = vld [vmem:[#allocation2 + $0x48] sm:$0xff]
    %v57 = vld [vmem:[#allocation2 + $0x50] sm:$0xff]
    %v58 = vld [vmem:[#allocation2 + $0x58] sm:$0xff]
    %v59 = vld [vmem:[#allocation2 + $0x60] sm:$0xff]
    %v60 = vld [vmem:[#allocation2 + $0x68] sm:$0xff]
    %v61 = vld [vmem:[#allocation2 + $0x70] sm:$0xff]
    %v62 = vld [vmem:[#allocation2 + $0x78] sm:$0xff]
    %v63 = vld [vmem:[#allocation2 + $0x80] sm:$0xff]
    %v64 = vld [vmem:[#allocation2 + $0x88] sm:$0xff]
    %v65 = vld [vmem:[#allocation2 + $0x90] sm:$0xff]
    %v66 = vld [vmem:[#allocation2 + $0x98] sm:$0xff]
    %v67 = vld [vmem:[#allocation2 + $0xa0] sm:$0xff]
    %v68 = vld [vmem:[#allocation2 + $0xa8] sm:$0xff]
    %v69 = vld [vmem:[#allocation2 + $0xb0] sm:$0xff]
    %v70 = vld [vmem:[#allocation2 + $0xb8] sm:$0xff]
    %v71 = vld [vmem:[#allocation2 + $0xc0] sm:$0xff]
    %v72 = vld [vmem:[#allocation2 + $0xc8] sm:$0xff]
    %v73 = vld [vmem:[#allocation2 + $0xd0] sm:$0xff]
    %v74 = vld [vmem:[#allocation2 + $0xd8] sm:$0xff]
    %v75 = vld [vmem:[#allocation2 + $0xe0] sm:$0xff]
    %v76 = vld [vmem:[#allocation2 + $0xe8] sm:$0xff]
    %v77 = vld [vmem:[#allocation2 + $0xf0] sm:$0xff]
    %v78 = vld [vmem:[#allocation2 + $0xf8] sm:$0xff]
    %v79 = vld [vmem:[#allocation2 + $0x100] sm:$0xff]
    %v80 = vld [vmem:[#allocation2 + $0x108] sm:$0xff]
    %v81 = vld [vmem:[#allocation2 + $0x110] sm:$0xff]
    %v82 = vld [vmem:[#allocation2 + $0x118] sm:$0xff]
    %v83 = vld [vmem:[#allocation2 + $0x120] sm:$0xff]
    %v84 = vld [vmem:[#allocation2 + $0x128] sm:$0xff]
    %v85 = vld [vmem:[#allocation2 + $0x130] sm:$0xff]
    %v86 = vld [vmem:[#allocation2 + $0x138] sm:$0xff]
    %v87 = vld [vmem:[#allocation2 + $0x140] sm:$0xff]
    %v88 = vld [vmem:[#allocation2 + $0x148] sm:$0xff]
    %v89 = vld [vmem:[#allocation2 + $0x150] sm:$0xff]
    %v90 = vld [vmem:[#allocation2 + $0x158] sm:$0xff]
    %v91 = vld [vmem:[#allocation2 + $0x160] sm:$0xff]
    %v92 = vld [vmem:[#allocation2 + $0x168] sm:$0xff]
    %v93 = vld [vmem:[#allocation2 + $0x170] sm:$0xff]
    %v94 = vld [vmem:[#allocation2 + $0x178] sm:$0xff]
    %v95 = vld [vmem:[#allocation2 + $0x180] sm:$0x1]
    %v96 = vld [vmem:[#allocation2 + $0x188] sm:$0x1]
    %v97 = vld [vmem:[#allocation2 + $0x190] sm:$0x1]
    %v98 = vld [vmem:[#allocation2 + $0x198] sm:$0x1]
    %v99 = vld [vmem:[#allocation2 + $0x1a0] sm:$0x1]
    %v100 = vld [vmem:[#allocation2 + $0x1a8] sm:$0x1]
    %v101 = vld [vmem:[#allocation2 + $0x1b0] sm:$0x1]
    %v102 = vld [vmem:[#allocation2 + $0x1b8] sm:$0x1]
    %v103 = vld [vmem:[#allocation2 + $0x1c0] sm:$0x1]
    %v104 = vld [vmem:[#allocation2 + $0x1c8] sm:$0x1]
    %v105 = vld [vmem:[#allocation2 + $0x1d0] sm:$0x1]
    %v106 = vld [vmem:[#allocation2 + $0x1d8] sm:$0x1]
    %vm107 = vcmask 269312
    %v109 = vsel %vm107, %v46, 0
    %vm111 = vcmask 1040384
    %v113 = vsel %vm111, %v95, 0
    %v116 = vsel %vm111, %v96, 0
    %v119 = vsel %vm111, %v97, 0
    %v122 = vsel %vm111, %v98, 0
    %v125 = vsel %vm111, %v99, 0
    %v128 = vsel %vm111, %v100, 0
    %v131 = vsel %vm111, %v101, 0
    %v134 = vsel %vm111, %v102, 0
    %v137 = vsel %vm111, %v103, 0
    %v140 = vsel %vm111, %v104, 0
    %v143 = vsel %vm111, %v105, 0
    %v146 = vsel %vm111, %v106, 0
    %148 = vmatprep.subr.mxu0 %v48
    %149 = vmatpush1.msra.mxu0 %v47
    %150 = vmatprep.subr.mxu0 %v60
    %151 = vmatpush1.msra.mxu0 %v59
    %152 = vmatprep.subr.mxu0 %v72
    %153 = vmatpush1.msra.mxu0 %v71
    %154 = vmatprep.subr.mxu0 %v84
    %155 = vmatpush1.msra.mxu0 %v83
    %156 = vmatprep.subr.mxu0 %v116
    %157 = vmatpush1.msra.mxu0 %v113
    %158 = vmatprep.subr.mxu0 0.0
    %159 = vmatpush1.msra.mxu0 0.0
    %160 = vmatprep.subr.mxu0 0.0
    %161 = vmatpush1.msra.mxu0 0.0
    %162 = vmatprep.subr.mxu0 0.0
    %163 = vmatpush1.msra.mxu0 0.0
    %164 = vmatprep.subr.mxu0 0.0
    %165 = vmatpush1.msra.mxu0 0.0
    %166 = vmatprep.subr.mxu0 0.0
    %167 = vmatpush1.msra.mxu0 0.0
    %168 = vmatprep.subr.mxu0 0.0
    %169 = vmatpush1.msra.mxu0 0.0
    %170 = vmatprep.subr.mxu0 0.0
    %171 = vmatpush1.msra.mxu0 0.0
    %172 = vmatprep.subr.mxu0 0.0
    %173 = vmatpush1.msra.mxu0 0.0
    %174 = vmatprep.subr.mxu0 0.0
    %175 = vmatpush1.msra.mxu0 0.0
    %176 = vmatprep.subr.mxu0 0.0
    %177 = vmatpush1.msra.mxu0 0.0
    %178 = vmatprep.subr.mxu0 0.0
    %179 = vmatpush1.msra.mxu0 0.0
    %180 = vmatprep.subr.mxu0 0.0
    %181 = vmatpush1.msra.mxu0 0.0
    %182 = vmatprep.subr.mxu0 0.0
    %183 = vmatpush1.msra.mxu0 0.0
    %184 = vmatprep.subr.mxu0 0.0
    %185 = vmatpush1.msra.mxu0 0.0
    %186 = vmatprep.subr.mxu0 0.0
    %187 = vmatpush1.msra.mxu0 0.0
    %188 = vmatprep.subr.mxu0 0.0
    %189 = vmatpush1.msra.mxu0 0.0
    %190 = vmatprep.subr.mxu0 0.0
    %191 = vmatpush1.msra.mxu0 0.0
    %192 = vmatprep.subr.mxu0 0.0
    %193 = vmatpush1.msra.mxu0 0.0
    %194 = vmatprep.subr.mxu0 0.0
    %195 = vmatpush1.msra.mxu0 0.0
    %196 = vmatprep.subr.mxu0 0.0
    %197 = vmatpush1.msra.mxu0 0.0
    %198 = vmatprep.subr.mxu0 0.0
    %199 = vmatpush1.msra.mxu0 0.0
    %200 = vmatprep.subr.mxu0 0.0
    %201 = vmatpush1.msra.mxu0 0.0
    %202 = vmatprep.subr.mxu0 0.0
    %203 = vmatpush1.msra.mxu0 0.0
    %204 = vmatprep.subr.mxu0 0.0
    %205 = vmatpush1.msra.mxu0 0.0
    %206 = vmatprep.subr.mxu0 0.0
    %207 = vmatpush1.msra.mxu0 0.0
    %208 = vmatprep.subr.mxu0 0.0
    %209 = vmatpush1.msra.mxu0 0.0
    %210 = vmatprep.subr.mxu0 0.0
    %211 = vmatpush1.msra.mxu0 0.0
    %212 = vmatprep.mubr.f32.mxu0 0.0
    %213 = vmatmul.mubr.f32.gmra.mrb[0].mxu0 %v109
    %v214 = vpop.f32.mrb[0].mxu0
    %v215 = vadd.f32 0.0, %v214
    %v216 = vpop.f32.mrb[0].mxu0
    %v217 = vadd.f32 0.0, %v216
    %218 = vdwg.mxu0
    %219 = vmatprep.subr.mxu0 %v50
    %220 = vmatpush1.msra.mxu0 %v49
    %221 = vmatprep.subr.mxu0 %v62
    %222 = vmatpush1.msra.mxu0 %v61
    %223 = vmatprep.subr.mxu0 %v74
    %224 = vmatpush1.msra.mxu0 %v73
    %225 = vmatprep.subr.mxu0 %v86
    %226 = vmatpush1.msra.mxu0 %v85
    %227 = vmatprep.subr.mxu0 %v122
    %228 = vmatpush1.msra.mxu0 %v119
    %229 = vmatprep.subr.mxu0 0.0
    %230 = vmatpush1.msra.mxu0 0.0
    %231 = vmatprep.subr.mxu0 0.0
    %232 = vmatpush1.msra.mxu0 0.0
    %233 = vmatprep.subr.mxu0 0.0
    %234 = vmatpush1.msra.mxu0 0.0
    %235 = vmatprep.subr.mxu0 0.0
    %236 = vmatpush1.msra.mxu0 0.0
    %237 = vmatprep.subr.mxu0 0.0
    %238 = vmatpush1.msra.mxu0 0.0
    %239 = vmatprep.subr.mxu0 0.0
    %240 = vmatpush1.msra.mxu0 0.0
    %241 = vmatprep.subr.mxu0 0.0
    %242 = vmatpush1.msra.mxu0 0.0
    %243 = vmatprep.subr.mxu0 0.0
    %244 = vmatpush1.msra.mxu0 0.0
    %245 = vmatprep.subr.mxu0 0.0
    %246 = vmatpush1.msra.mxu0 0.0
    %247 = vmatprep.subr.mxu0 0.0
    %248 = vmatpush1.msra.mxu0 0.0
    %249 = vmatprep.subr.mxu0 0.0
    %250 = vmatpush1.msra.mxu0 0.0
    %251 = vmatprep.subr.mxu0 0.0
    %252 = vmatpush1.msra.mxu0 0.0
    %253 = vmatprep.subr.mxu0 0.0
    %254 = vmatpush1.msra.mxu0 0.0
    %255 = vmatprep.subr.mxu0 0.0
    %256 = vmatpush1.msra.mxu0 0.0
    %257 = vmatprep.subr.mxu0 0.0
    %258 = vmatpush1.msra.mxu0 0.0
    %259 = vmatprep.subr.mxu0 0.0
    %260 = vmatpush1.msra.mxu0 0.0
    %261 = vmatprep.subr.mxu0 0.0
    %262 = vmatpush1.msra.mxu0 0.0
    %263 = vmatprep.subr.mxu0 0.0
    %264 = vmatpush1.msra.mxu0 0.0
    %265 = vmatprep.subr.mxu0 0.0
    %266 = vmatpush1.msra.mxu0 0.0
    %267 = vmatprep.subr.mxu0 0.0
    %268 = vmatpush1.msra.mxu0 0.0
    %269 = vmatprep.subr.mxu0 0.0
    %270 = vmatpush1.msra.mxu0 0.0
    %271 = vmatprep.subr.mxu0 0.0
    %272 = vmatpush1.msra.mxu0 0.0
    %273 = vmatprep.subr.mxu0 0.0
    %274 = vmatpush1.msra.mxu0 0.0
    %275 = vmatprep.subr.mxu0 0.0
    %276 = vmatpush1.msra.mxu0 0.0
    %277 = vmatprep.subr.mxu0 0.0
    %278 = vmatpush1.msra.mxu0 0.0
    %279 = vmatprep.subr.mxu0 0.0
    %280 = vmatpush1.msra.mxu0 0.0
    %281 = vmatprep.subr.mxu0 0.0
    %282 = vmatpush1.msra.mxu0 0.0
    %283 = vmatprep.mubr.f32.mxu0 0.0
    %284 = vmatmul.mubr.f32.gmra.mrb[0].mxu0 %v109
    %v285 = vpop.f32.mrb[0].mxu0
    %v286 = vadd.f32 0.0, %v285
    %v287 = vpop.f32.mrb[0].mxu0
    %v288 = vadd.f32 0.0, %v287
    %289 = vdwg.mxu0
    %290 = vmatprep.subr.mxu0 %v52
    %291 = vmatpush1.msra.mxu0 %v51
    %292 = vmatprep.subr.mxu0 %v64
    %293 = vmatpush1.msra.mxu0 %v63
    %294 = vmatprep.subr.mxu0 %v76
    %295 = vmatpush1.msra.mxu0 %v75
    %296 = vmatprep.subr.mxu0 %v88
    %297 = vmatpush1.msra.mxu0 %v87
    %298 = vmatprep.subr.mxu0 %v128
    %299 = vmatpush1.msra.mxu0 %v125
    %300 = vmatprep.subr.mxu0 0.0
    %301 = vmatpush1.msra.mxu0 0.0
    %302 = vmatprep.subr.mxu0 0.0
    %303 = vmatpush1.msra.mxu0 0.0
    %304 = vmatprep.subr.mxu0 0.0
    %305 = vmatpush1.msra.mxu0 0.0
    %306 = vmatprep.subr.mxu0 0.0
    %307 = vmatpush1.msra.mxu0 0.0
    %308 = vmatprep.subr.mxu0 0.0
    %309 = vmatpush1.msra.mxu0 0.0
    %310 = vmatprep.subr.mxu0 0.0
    %311 = vmatpush1.msra.mxu0 0.0
    %312 = vmatprep.subr.mxu0 0.0
    %313 = vmatpush1.msra.mxu0 0.0
    %314 = vmatprep.subr.mxu0 0.0
    %315 = vmatpush1.msra.mxu0 0.0
    %316 = vmatprep.subr.mxu0 0.0
    %317 = vmatpush1.msra.mxu0 0.0
    %318 = vmatprep.subr.mxu0 0.0
    %319 = vmatpush1.msra.mxu0 0.0
    %320 = vmatprep.subr.mxu0 0.0
    %321 = vmatpush1.msra.mxu0 0.0
    %322 = vmatprep.subr.mxu0 0.0
    %323 = vmatpush1.msra.mxu0 0.0
    %324 = vmatprep.subr.mxu0 0.0
    %325 = vmatpush1.msra.mxu0 0.0
    %326 = vmatprep.subr.mxu0 0.0
    %327 = vmatpush1.msra.mxu0 0.0
    %328 = vmatprep.subr.mxu0 0.0
    %329 = vmatpush1.msra.mxu0 0.0
    %330 = vmatprep.subr.mxu0 0.0
    %331 = vmatpush1.msra.mxu0 0.0
    %332 = vmatprep.subr.mxu0 0.0
    %333 = vmatpush1.msra.mxu0 0.0
    %334 = vmatprep.subr.mxu0 0.0
    %335 = vmatpush1.msra.mxu0 0.0
    %336 = vmatprep.subr.mxu0 0.0
    %337 = vmatpush1.msra.mxu0 0.0
    %338 = vmatprep.subr.mxu0 0.0
    %339 = vmatpush1.msra.mxu0 0.0
    %340 = vmatprep.subr.mxu0 0.0
    %341 = vmatpush1.msra.mxu0 0.0
    %342 = vmatprep.subr.mxu0 0.0
    %343 = vmatpush1.msra.mxu0 0.0
    %344 = vmatprep.subr.mxu0 0.0
    %345 = vmatpush1.msra.mxu0 0.0
    %346 = vmatprep.subr.mxu0 0.0
    %347 = vmatpush1.msra.mxu0 0.0
    %348 = vmatprep.subr.mxu0 0.0
    %349 = vmatpush1.msra.mxu0 0.0
    %350 = vmatprep.subr.mxu0 0.0
    %351 = vmatpush1.msra.mxu0 0.0
    %352 = vmatprep.subr.mxu0 0.0
    %353 = vmatpush1.msra.mxu0 0.0
    %354 = vmatprep.mubr.f32.mxu0 0.0
    %355 = vmatmul.mubr.f32.gmra.mrb[0].mxu0 %v109
    %v356 = vpop.f32.mrb[0].mxu0
    %v357 = vadd.f32 0.0, %v356
    %v358 = vpop.f32.mrb[0].mxu0
    %v359 = vadd.f32 0.0, %v358
    %360 = vdwg.mxu0
    %361 = vmatprep.subr.mxu0 %v54
    %362 = vmatpush1.msra.mxu0 %v53
    %363 = vmatprep.subr.mxu0 %v66
    %364 = vmatpush1.msra.mxu0 %v65
    %365 = vmatprep.subr.mxu0 %v78
    %366 = vmatpush1.msra.mxu0 %v77
    %367 = vmatprep.subr.mxu0 %v90
    %368 = vmatpush1.msra.mxu0 %v89
    %369 = vmatprep.subr.mxu0 %v134
    %370 = vmatpush1.msra.mxu0 %v131
    %371 = vmatprep.subr.mxu0 0.0
    %372 = vmatpush1.msra.mxu0 0.0
    %373 = vmatprep.subr.mxu0 0.0
    %374 = vmatpush1.msra.mxu0 0.0
    %375 = vmatprep.subr.mxu0 0.0
    %376 = vmatpush1.msra.mxu0 0.0
    %377 = vmatprep.subr.mxu0 0.0
    %378 = vmatpush1.msra.mxu0 0.0
    %379 = vmatprep.subr.mxu0 0.0
    %380 = vmatpush1.msra.mxu0 0.0
    %381 = vmatprep.subr.mxu0 0.0
    %382 = vmatpush1.msra.mxu0 0.0
    %383 = vmatprep.subr.mxu0 0.0
    %384 = vmatpush1.msra.mxu0 0.0
    %385 = vmatprep.subr.mxu0 0.0
    %386 = vmatpush1.msra.mxu0 0.0
    %387 = vmatprep.subr.mxu0 0.0
    %388 = vmatpush1.msra.mxu0 0.0
    %389 = vmatprep.subr.mxu0 0.0
    %390 = vmatpush1.msra.mxu0 0.0
    %391 = vmatprep.subr.mxu0 0.0
    %392 = vmatpush1.msra.mxu0 0.0
    %393 = vmatprep.subr.mxu0 0.0
    %394 = vmatpush1.msra.mxu0 0.0
    %395 = vmatprep.subr.mxu0 0.0
    %396 = vmatpush1.msra.mxu0 0.0
    %397 = vmatprep.subr.mxu0 0.0
    %398 = vmatpush1.msra.mxu0 0.0
    %399 = vmatprep.subr.mxu0 0.0
    %400 = vmatpush1.msra.mxu0 0.0
    %401 = vmatprep.subr.mxu0 0.0
    %402 = vmatpush1.msra.mxu0 0.0
    %403 = vmatprep.subr.mxu0 0.0
    %404 = vmatpush1.msra.mxu0 0.0
    %405 = vmatprep.subr.mxu0 0.0
    %406 = vmatpush1.msra.mxu0 0.0
    %407 = vmatprep.subr.mxu0 0.0
    %408 = vmatpush1.msra.mxu0 0.0
    %409 = vmatprep.subr.mxu0 0.0
    %410 = vmatpush1.msra.mxu0 0.0
    %411 = vmatprep.subr.mxu0 0.0
    %412 = vmatpush1.msra.mxu0 0.0
    %413 = vmatprep.subr.mxu0 0.0
    %414 = vmatpush1.msra.mxu0 0.0
    %415 = vmatprep.subr.mxu0 0.0
    %416 = vmatpush1.msra.mxu0 0.0
    %417 = vmatprep.subr.mxu0 0.0
    %418 = vmatpush1.msra.mxu0 0.0
    %419 = vmatprep.subr.mxu0 0.0
    %420 = vmatpush1.msra.mxu0 0.0
    %421 = vmatprep.subr.mxu0 0.0
    %422 = vmatpush1.msra.mxu0 0.0
    %423 = vmatprep.subr.mxu0 0.0
    %424 = vmatpush1.msra.mxu0 0.0
    %425 = vmatprep.mubr.f32.mxu0 0.0
    %426 = vmatmul.mubr.f32.gmra.mrb[0].mxu0 %v109
    %v427 = vpop.f32.mrb[0].mxu0
    %v428 = vadd.f32 0.0, %v427
    %v429 = vpop.f32.mrb[0].mxu0
    %v430 = vadd.f32 0.0, %v429
    %431 = vdwg.mxu0
    %432 = vmatprep.subr.mxu0 %v56
    %433 = vmatpush1.msra.mxu0 %v55
    %434 = vmatprep.subr.mxu0 %v68
    %435 = vmatpush1.msra.mxu0 %v67
    %436 = vmatprep.subr.mxu0 %v80
    %437 = vmatpush1.msra.mxu0 %v79
    %438 = vmatprep.subr.mxu0 %v92
    %439 = vmatpush1.msra.mxu0 %v91
    %440 = vmatprep.subr.mxu0 %v140
    %441 = vmatpush1.msra.mxu0 %v137
    %442 = vmatprep.subr.mxu0 0.0
    %443 = vmatpush1.msra.mxu0 0.0
    %444 = vmatprep.subr.mxu0 0.0
    %445 = vmatpush1.msra.mxu0 0.0
    %446 = vmatprep.subr.mxu0 0.0
    %447 = vmatpush1.msra.mxu0 0.0
    %448 = vmatprep.subr.mxu0 0.0
    %449 = vmatpush1.msra.mxu0 0.0
    %450 = vmatprep.subr.mxu0 0.0
    %451 = vmatpush1.msra.mxu0 0.0
    %452 = vmatprep.subr.mxu0 0.0
    %453 = vmatpush1.msra.mxu0 0.0
    %454 = vmatprep.subr.mxu0 0.0
    %455 = vmatpush1.msra.mxu0 0.0
    %456 = vmatprep.subr.mxu0 0.0
    %457 = vmatpush1.msra.mxu0 0.0
    %458 = vmatprep.subr.mxu0 0.0
    %459 = vmatpush1.msra.mxu0 0.0
    %460 = vmatprep.subr.mxu0 0.0
    %461 = vmatpush1.msra.mxu0 0.0
    %462 = vmatprep.subr.mxu0 0.0
    %463 = vmatpush1.msra.mxu0 0.0
    %464 = vmatprep.subr.mxu0 0.0
    %465 = vmatpush1.msra.mxu0 0.0
    %466 = vmatprep.subr.mxu0 0.0
    %467 = vmatpush1.msra.mxu0 0.0
    %468 = vmatprep.subr.mxu0 0.0
    %469 = vmatpush1.msra.mxu0 0.0
    %470 = vmatprep.subr.mxu0 0.0
    %471 = vmatpush1.msra.mxu0 0.0
    %472 = vmatprep.subr.mxu0 0.0
    %473 = vmatpush1.msra.mxu0 0.0
    %474 = vmatprep.subr.mxu0 0.0
    %475 = vmatpush1.msra.mxu0 0.0
    %476 = vmatprep.subr.mxu0 0.0
    %477 = vmatpush1.msra.mxu0 0.0
    %478 = vmatprep.subr.mxu0 0.0
    %479 = vmatpush1.msra.mxu0 0.0
    %480 = vmatprep.subr.mxu0 0.0
    %481 = vmatpush1.msra.mxu0 0.0
    %482 = vmatprep.subr.mxu0 0.0
    %483 = vmatpush1.msra.mxu0 0.0
    %484 = vmatprep.subr.mxu0 0.0
    %485 = vmatpush1.msra.mxu0 0.0
    %486 = vmatprep.subr.mxu0 0.0
    %487 = vmatpush1.msra.mxu0 0.0
    %488 = vmatprep.subr.mxu0 0.0
    %489 = vmatpush1.msra.mxu0 0.0
    %490 = vmatprep.subr.mxu0 0.0
    %491 = vmatpush1.msra.mxu0 0.0
    %492 = vmatprep.subr.mxu0 0.0
    %493 = vmatpush1.msra.mxu0 0.0
    %494 = vmatprep.subr.mxu0 0.0
    %495 = vmatpush1.msra.mxu0 0.0
    %496 = vmatprep.mubr.f32.mxu0 0.0
    %497 = vmatmul.mubr.f32.gmra.mrb[0].mxu0 %v109
    %v498 = vpop.f32.mrb[0].mxu0
    %v499 = vadd.f32 0.0, %v498
    %v500 = vpop.f32.mrb[0].mxu0
    %v501 = vadd.f32 0.0, %v500
    %502 = vdwg.mxu0
    %503 = vmatprep.subr.mxu0 %v58
    %504 = vmatpush1.msra.mxu0 %v57
    %505 = vmatprep.subr.mxu0 %v70
    %506 = vmatpush1.msra.mxu0 %v69
    %507 = vmatprep.subr.mxu0 %v82
    %508 = vmatpush1.msra.mxu0 %v81
    %509 = vmatprep.subr.mxu0 %v94
    %510 = vmatpush1.msra.mxu0 %v93
    %511 = vmatprep.subr.mxu0 %v146
    %512 = vmatpush1.msra.mxu0 %v143
    %513 = vmatprep.subr.mxu0 0.0
    %514 = vmatpush1.msra.mxu0 0.0
    %515 = vmatprep.subr.mxu0 0.0
    %516 = vmatpush1.msra.mxu0 0.0
    %517 = vmatprep.subr.mxu0 0.0
    %518 = vmatpush1.msra.mxu0 0.0
    %519 = vmatprep.subr.mxu0 0.0
    %520 = vmatpush1.msra.mxu0 0.0
    %521 = vmatprep.subr.mxu0 0.0
    %522 = vmatpush1.msra.mxu0 0.0
    %523 = vmatprep.subr.mxu0 0.0
    %524 = vmatpush1.msra.mxu0 0.0
    %525 = vmatprep.subr.mxu0 0.0
    %526 = vmatpush1.msra.mxu0 0.0
    %527 = vmatprep.subr.mxu0 0.0
    %528 = vmatpush1.msra.mxu0 0.0
    %529 = vmatprep.subr.mxu0 0.0
    %530 = vmatpush1.msra.mxu0 0.0
    %531 = vmatprep.subr.mxu0 0.0
    %532 = vmatpush1.msra.mxu0 0.0
    %533 = vmatprep.subr.mxu0 0.0
    %534 = vmatpush1.msra.mxu0 0.0
    %535 = vmatprep.subr.mxu0 0.0
    %536 = vmatpush1.msra.mxu0 0.0
    %537 = vmatprep.subr.mxu0 0.0
    %538 = vmatpush1.msra.mxu0 0.0
    %539 = vmatprep.subr.mxu0 0.0
    %540 = vmatpush1.msra.mxu0 0.0
    %541 = vmatprep.subr.mxu0 0.0
    %542 = vmatpush1.msra.mxu0 0.0
    %543 = vmatprep.subr.mxu0 0.0
    %544 = vmatpush1.msra.mxu0 0.0
    %545 = vmatprep.subr.mxu0 0.0
    %546 = vmatpush1.msra.mxu0 0.0
    %547 = vmatprep.subr.mxu0 0.0
    %548 = vmatpush1.msra.mxu0 0.0
    %549 = vmatprep.subr.mxu0 0.0
    %550 = vmatpush1.msra.mxu0 0.0
    %551 = vmatprep.subr.mxu0 0.0
    %552 = vmatpush1.msra.mxu0 0.0
    %553 = vmatprep.subr.mxu0 0.0
    %554 = vmatpush1.msra.mxu0 0.0
    %555 = vmatprep.subr.mxu0 0.0
    %556 = vmatpush1.msra.mxu0 0.0
    %557 = vmatprep.subr.mxu0 0.0
    %558 = vmatpush1.msra.mxu0 0.0
    %559 = vmatprep.subr.mxu0 0.0
    %560 = vmatpush1.msra.mxu0 0.0
    %561 = vmatprep.subr.mxu0 0.0
    %562 = vmatpush1.msra.mxu0 0.0
    %563 = vmatprep.subr.mxu0 0.0
    %564 = vmatpush1.msra.mxu0 0.0
    %565 = vmatprep.subr.mxu0 0.0
    %566 = vmatpush1.msra.mxu0 0.0
    %567 = vmatprep.mubr.f32.mxu0 0.0
    %568 = vmatmul.mubr.f32.gmra.mrb[0].mxu0 %v109
    %v569 = vpop.f32.mrb[0].mxu0
    %v570 = vadd.f32 0.0, %v569
    %v571 = vpop.f32.mrb[0].mxu0
    %v572 = vadd.f32 0.0, %v571
    %573 = vdwg.mxu0
    %v574 = vmax.f32 %v215, 0.0
    %v575 = vmax.f32 %v217, 0.0
    %v576 = vmax.f32 %v286, 0.0
    %v577 = vmax.f32 %v288, 0.0
    %v578 = vmax.f32 %v357, 0.0
    %v579 = vmax.f32 %v359, 0.0
    %v580 = vmax.f32 %v428, 0.0
    %v581 = vmax.f32 %v430, 0.0
    %v582 = vmax.f32 %v499, 0.0
    %v583 = vmax.f32 %v501, 0.0
    %v584 = vmax.f32 %v570, 0.0
    %v585 = vmax.f32 %v572, 0.0
    %v586 = vld [vmem:[#allocation5] sm:$0xff]
    %v587 = vld [vmem:[#allocation5 + $0x8] sm:$0xff]
    %v588 = vld [vmem:[#allocation5 + $0x10] sm:$0xff]
    %v589 = vld [vmem:[#allocation5 + $0x18] sm:$0xff]
    %v590 = vld [vmem:[#allocation5 + $0x20] sm:$0xff]
    %v591 = vld [vmem:[#allocation5 + $0x28] sm:$0xff]
    %v592 = vld [vmem:[#allocation5 + $0x30] sm:$0xff]
    %v593 = vld [vmem:[#allocation5 + $0x38] sm:$0xff]
    %v594 = vld [vmem:[#allocation5 + $0x40] sm:$0xff]
    %v595 = vld [vmem:[#allocation5 + $0x48] sm:$0xff]
    %v596 = vld [vmem:[#allocation5 + $0x50] sm:$0xff]
    %v597 = vld [vmem:[#allocation5 + $0x58] sm:$0xff]
    %v598 = vld [vmem:[#allocation5 + $0x60] sm:$0xff]
    %v599 = vld [vmem:[#allocation5 + $0x68] sm:$0xff]
    %v600 = vld [vmem:[#allocation5 + $0x70] sm:$0xff]
    %v601 = vld [vmem:[#allocation5 + $0x78] sm:$0xff]
    %v602 = vld [vmem:[#allocation5 + $0x80] sm:$0xff]
    %v603 = vld [vmem:[#allocation5 + $0x88] sm:$0xff]
    %v604 = vld [vmem:[#allocation5 + $0x90] sm:$0xff]
    %v605 = vld [vmem:[#allocation5 + $0x98] sm:$0xff]
    %v606 = vld [vmem:[#allocation5 + $0xa0] sm:$0xff]
    %v607 = vld [vmem:[#allocation5 + $0xa8] sm:$0xff]
    %v608 = vld [vmem:[#allocation5 + $0xb0] sm:$0xff]
    %v609 = vld [vmem:[#allocation5 + $0xb8] sm:$0xff]
    %v610 = vld [vmem:[#allocation5 + $0xc0] sm:$0xff]
    %v611 = vld [vmem:[#allocation5 + $0xc8] sm:$0xff]
    %v612 = vld [vmem:[#allocation5 + $0xd0] sm:$0xff]
    %v613 = vld [vmem:[#allocation5 + $0xd8] sm:$0xff]
    %v614 = vld [vmem:[#allocation5 + $0xe0] sm:$0xff]
    %v615 = vld [vmem:[#allocation5 + $0xe8] sm:$0xff]
    %v616 = vld [vmem:[#allocation5 + $0xf0] sm:$0xff]
    %v617 = vld [vmem:[#allocation5 + $0xf8] sm:$0xff]
    %v618 = vld [vmem:[#allocation5 + $0x100] sm:$0xff]
    %v619 = vld [vmem:[#allocation5 + $0x108] sm:$0xff]
    %v620 = vld [vmem:[#allocation5 + $0x110] sm:$0xff]
    %v621 = vld [vmem:[#allocation5 + $0x118] sm:$0xff]
    %v622 = vld [vmem:[#allocation5 + $0x120] sm:$0xff]
    %v623 = vld [vmem:[#allocation5 + $0x128] sm:$0xff]
    %v624 = vld [vmem:[#allocation5 + $0x130] sm:$0xff]
    %v625 = vld [vmem:[#allocation5 + $0x138] sm:$0xff]
    %v626 = vld [vmem:[#allocation5 + $0x140] sm:$0xff]
    %v627 = vld [vmem:[#allocation5 + $0x148] sm:$0xff]
    %v628 = vld [vmem:[#allocation5 + $0x150] sm:$0xff]
    %v629 = vld [vmem:[#allocation5 + $0x158] sm:$0xff]
    %v630 = vld [vmem:[#allocation5 + $0x160] sm:$0xff]
    %v631 = vld [vmem:[#allocation5 + $0x168] sm:$0xff]
    %v632 = vld [vmem:[#allocation5 + $0x170] sm:$0xff]
    %v633 = vld [vmem:[#allocation5 + $0x178] sm:$0xff]
    %v634 = vld [vmem:[#allocation5 + $0x180] sm:$0xff]
    %v635 = vld [vmem:[#allocation5 + $0x188] sm:$0xff]
    %v636 = vld [vmem:[#allocation5 + $0x190] sm:$0xff]
    %v637 = vld [vmem:[#allocation5 + $0x198] sm:$0xff]
    %v638 = vld [vmem:[#allocation5 + $0x1a0] sm:$0xff]
    %v639 = vld [vmem:[#allocation5 + $0x1a8] sm:$0xff]
    %v640 = vld [vmem:[#allocation5 + $0x1b0] sm:$0xff]
    %v641 = vld [vmem:[#allocation5 + $0x1b8] sm:$0xff]
    %v642 = vld [vmem:[#allocation5 + $0x1c0] sm:$0xff]
    %v643 = vld [vmem:[#allocation5 + $0x1c8] sm:$0xff]
    %v644 = vld [vmem:[#allocation5 + $0x1d0] sm:$0xff]
    %v645 = vld [vmem:[#allocation5 + $0x1d8] sm:$0xff]
    %v646 = vld [vmem:[#allocation5 + $0x1e0] sm:$0xff]
    %v647 = vld [vmem:[#allocation5 + $0x1e8] sm:$0xff]
    %v648 = vld [vmem:[#allocation5 + $0x1f0] sm:$0xff]
    %v649 = vld [vmem:[#allocation5 + $0x1f8] sm:$0xff]
    %v650 = vld [vmem:[#allocation5 + $0x200] sm:$0xff]
    %v651 = vld [vmem:[#allocation5 + $0x208] sm:$0xff]
    %v652 = vld [vmem:[#allocation5 + $0x210] sm:$0xff]
    %v653 = vld [vmem:[#allocation5 + $0x218] sm:$0xff]
    %v654 = vld [vmem:[#allocation5 + $0x220] sm:$0xff]
    %v655 = vld [vmem:[#allocation5 + $0x228] sm:$0xff]
    %v656 = vld [vmem:[#allocation5 + $0x230] sm:$0xff]
    %v657 = vld [vmem:[#allocation5 + $0x238] sm:$0xff]
    %v658 = vld [vmem:[#allocation5 + $0x240] sm:$0xff]
    %v659 = vld [vmem:[#allocation5 + $0x248] sm:$0xff]
    %v660 = vld [vmem:[#allocation5 + $0x250] sm:$0xff]
    %v661 = vld [vmem:[#allocation5 + $0x258] sm:$0xff]
    %v662 = vld [vmem:[#allocation5 + $0x260] sm:$0xff]
    %v663 = vld [vmem:[#allocation5 + $0x268] sm:$0xff]
    %v664 = vld [vmem:[#allocation5 + $0x270] sm:$0xff]
    %v665 = vld [vmem:[#allocation5 + $0x278] sm:$0xff]
    %v666 = vld [vmem:[#allocation5 + $0x280] sm:$0xff]
    %v667 = vld [vmem:[#allocation5 + $0x288] sm:$0xff]
    %v668 = vld [vmem:[#allocation5 + $0x290] sm:$0xff]
    %v669 = vld [vmem:[#allocation5 + $0x298] sm:$0xff]
    %v670 = vld [vmem:[#allocation5 + $0x2a0] sm:$0xff]
    %v671 = vld [vmem:[#allocation5 + $0x2a8] sm:$0xff]
    %v672 = vld [vmem:[#allocation5 + $0x2b0] sm:$0xff]
    %v673 = vld [vmem:[#allocation5 + $0x2b8] sm:$0xff]
    %v674 = vld [vmem:[#allocation5 + $0x2c0] sm:$0xff]
    %v675 = vld [vmem:[#allocation5 + $0x2c8] sm:$0xff]
    %v676 = vld [vmem:[#allocation5 + $0x2d0] sm:$0xff]
    %v677 = vld [vmem:[#allocation5 + $0x2d8] sm:$0xff]
    %v678 = vld [vmem:[#allocation5 + $0x2e0] sm:$0xff]
    %v679 = vld [vmem:[#allocation5 + $0x2e8] sm:$0xff]
    %v680 = vld [vmem:[#allocation5 + $0x2f0] sm:$0xff]
    %v681 = vld [vmem:[#allocation5 + $0x2f8] sm:$0xff]
    %v682 = vld [vmem:[#allocation5 + $0x300] sm:$0xff]
    %v683 = vld [vmem:[#allocation5 + $0x308] sm:$0xff]
    %v684 = vld [vmem:[#allocation5 + $0x310] sm:$0xff]
    %v685 = vld [vmem:[#allocation5 + $0x318] sm:$0xff]
    %v686 = vld [vmem:[#allocation5 + $0x320] sm:$0xff]
    %v687 = vld [vmem:[#allocation5 + $0x328] sm:$0xff]
    %v688 = vld [vmem:[#allocation5 + $0x330] sm:$0xff]
    %v689 = vld [vmem:[#allocation5 + $0x338] sm:$0xff]
    %v690 = vld [vmem:[#allocation5 + $0x340] sm:$0xff]
    %v691 = vld [vmem:[#allocation5 + $0x348] sm:$0xff]
    %v692 = vld [vmem:[#allocation5 + $0x350] sm:$0xff]
    %v693 = vld [vmem:[#allocation5 + $0x358] sm:$0xff]
    %v694 = vld [vmem:[#allocation5 + $0x360] sm:$0xff]
    %v695 = vld [vmem:[#allocation5 + $0x368] sm:$0xff]
    %v696 = vld [vmem:[#allocation5 + $0x370] sm:$0xff]
    %v697 = vld [vmem:[#allocation5 + $0x378] sm:$0xff]
    %v698 = vld [vmem:[#allocation5 + $0x380] sm:$0xff]
    %v699 = vld [vmem:[#allocation5 + $0x388] sm:$0xff]
    %v700 = vld [vmem:[#allocation5 + $0x390] sm:$0xff]
    %v701 = vld [vmem:[#allocation5 + $0x398] sm:$0xff]
    %v702 = vld [vmem:[#allocation5 + $0x3a0] sm:$0xff]
    %v703 = vld [vmem:[#allocation5 + $0x3a8] sm:$0xff]
    %v704 = vld [vmem:[#allocation5 + $0x3b0] sm:$0xff]
    %v705 = vld [vmem:[#allocation5 + $0x3b8] sm:$0xff]
    %v706 = vld [vmem:[#allocation5 + $0x3c0] sm:$0xff]
    %v707 = vld [vmem:[#allocation5 + $0x3c8] sm:$0xff]
    %v708 = vld [vmem:[#allocation5 + $0x3d0] sm:$0xff]
    %v709 = vld [vmem:[#allocation5 + $0x3d8] sm:$0xff]
    %v710 = vld [vmem:[#allocation5 + $0x3e0] sm:$0xff]
    %v711 = vld [vmem:[#allocation5 + $0x3e8] sm:$0xff]
    %v712 = vld [vmem:[#allocation5 + $0x3f0] sm:$0xff]
    %v713 = vld [vmem:[#allocation5 + $0x3f8] sm:$0xff]
    %v714 = vld [vmem:[#allocation5 + $0x400] sm:$0xff]
    %v715 = vld [vmem:[#allocation5 + $0x408] sm:$0xff]
    %v716 = vld [vmem:[#allocation5 + $0x410] sm:$0xff]
    %v717 = vld [vmem:[#allocation5 + $0x418] sm:$0xff]
    %v718 = vld [vmem:[#allocation5 + $0x420] sm:$0xff]
    %v719 = vld [vmem:[#allocation5 + $0x428] sm:$0xff]
    %v720 = vld [vmem:[#allocation5 + $0x430] sm:$0xff]
    %v721 = vld [vmem:[#allocation5 + $0x438] sm:$0xff]
    %v722 = vld [vmem:[#allocation5 + $0x440] sm:$0xff]
    %v723 = vld [vmem:[#allocation5 + $0x448] sm:$0xff]
    %v724 = vld [vmem:[#allocation5 + $0x450] sm:$0xff]
    %v725 = vld [vmem:[#allocation5 + $0x458] sm:$0xff]
    %v726 = vld [vmem:[#allocation5 + $0x460] sm:$0xff]
    %v727 = vld [vmem:[#allocation5 + $0x468] sm:$0xff]
    %v728 = vld [vmem:[#allocation5 + $0x470] sm:$0xff]
    %v729 = vld [vmem:[#allocation5 + $0x478] sm:$0xff]
    %v730 = vld [vmem:[#allocation5 + $0x480] sm:$0xff]
    %v731 = vld [vmem:[#allocation5 + $0x488] sm:$0xff]
    %v732 = vld [vmem:[#allocation5 + $0x490] sm:$0xff]
    %v733 = vld [vmem:[#allocation5 + $0x498] sm:$0xff]
    %v734 = vld [vmem:[#allocation5 + $0x4a0] sm:$0xff]
    %v735 = vld [vmem:[#allocation5 + $0x4a8] sm:$0xff]
    %v736 = vld [vmem:[#allocation5 + $0x4b0] sm:$0xff]
    %v737 = vld [vmem:[#allocation5 + $0x4b8] sm:$0xff]
    %v738 = vld [vmem:[#allocation5 + $0x4c0] sm:$0xff]
    %v739 = vld [vmem:[#allocation5 + $0x4c8] sm:$0xff]
    %v740 = vld [vmem:[#allocation5 + $0x4d0] sm:$0xff]
    %v741 = vld [vmem:[#allocation5 + $0x4d8] sm:$0xff]
    %v742 = vld [vmem:[#allocation5 + $0x4e0] sm:$0xff]
    %v743 = vld [vmem:[#allocation5 + $0x4e8] sm:$0xff]
    %v744 = vld [vmem:[#allocation5 + $0x4f0] sm:$0xff]
    %v745 = vld [vmem:[#allocation5 + $0x4f8] sm:$0xff]
    %v746 = vld [vmem:[#allocation5 + $0x500] sm:$0xff]
    %v747 = vld [vmem:[#allocation5 + $0x508] sm:$0xff]
    %v748 = vld [vmem:[#allocation5 + $0x510] sm:$0xff]
    %v749 = vld [vmem:[#allocation5 + $0x518] sm:$0xff]
    %v750 = vld [vmem:[#allocation5 + $0x520] sm:$0xff]
    %v751 = vld [vmem:[#allocation5 + $0x528] sm:$0xff]
    %v752 = vld [vmem:[#allocation5 + $0x530] sm:$0xff]
    %v753 = vld [vmem:[#allocation5 + $0x538] sm:$0xff]
    %v754 = vld [vmem:[#allocation5 + $0x540] sm:$0xff]
    %v755 = vld [vmem:[#allocation5 + $0x548] sm:$0xff]
    %v756 = vld [vmem:[#allocation5 + $0x550] sm:$0xff]
    %v757 = vld [vmem:[#allocation5 + $0x558] sm:$0xff]
    %v758 = vld [vmem:[#allocation5 + $0x560] sm:$0xff]
    %v759 = vld [vmem:[#allocation5 + $0x568] sm:$0xff]
    %v760 = vld [vmem:[#allocation5 + $0x570] sm:$0xff]
    %v761 = vld [vmem:[#allocation5 + $0x578] sm:$0xff]
    %v762 = vld [vmem:[#allocation5 + $0x580] sm:$0xff]
    %v763 = vld [vmem:[#allocation5 + $0x588] sm:$0xff]
    %v764 = vld [vmem:[#allocation5 + $0x590] sm:$0xff]
    %v765 = vld [vmem:[#allocation5 + $0x598] sm:$0xff]
    %v766 = vld [vmem:[#allocation5 + $0x5a0] sm:$0xff]
    %v767 = vld [vmem:[#allocation5 + $0x5a8] sm:$0xff]
    %v768 = vld [vmem:[#allocation5 + $0x5b0] sm:$0xff]
    %v769 = vld [vmem:[#allocation5 + $0x5b8] sm:$0xff]
    %v770 = vld [vmem:[#allocation5 + $0x5c0] sm:$0xff]
    %v771 = vld [vmem:[#allocation5 + $0x5c8] sm:$0xff]
    %v772 = vld [vmem:[#allocation5 + $0x5d0] sm:$0xff]
    %v773 = vld [vmem:[#allocation5 + $0x5d8] sm:$0xff]
    %v774 = vld [vmem:[#allocation5 + $0x5e0] sm:$0xff]
    %v775 = vld [vmem:[#allocation5 + $0x5e8] sm:$0xff]
    %v776 = vld [vmem:[#allocation5 + $0x5f0] sm:$0xff]
    %v777 = vld [vmem:[#allocation5 + $0x5f8] sm:$0xff]
    %v778 = vld [vmem:[%s3] sm:$0x1]
    %v780 = vlaneseq
    %v781 = vshrl.u32 %v780, 7
    %v782 = vsub.s32 0, %v781
    %v783 = vrot.slane %v778, %v782
    %785 = vmatprep.subr.mxu0 0.0
    %786 = vmatpush1.msra.mxu0 %v586
    %787 = vmatprep.subr.mxu0 0.0
    %788 = vmatpush1.msra.mxu0 %v587
    %789 = vmatprep.subr.mxu0 0.0
    %790 = vmatpush1.msra.mxu0 %v588
    %791 = vmatprep.subr.mxu0 0.0
    %792 = vmatpush1.msra.mxu0 %v589
    %793 = vmatprep.subr.mxu0 0.0
    %794 = vmatpush1.msra.mxu0 %v590
    %795 = vmatprep.subr.mxu0 0.0
    %796 = vmatpush1.msra.mxu0 %v591
    %797 = vmatprep.subr.mxu0 0.0
    %798 = vmatpush1.msra.mxu0 %v592
    %799 = vmatprep.subr.mxu0 0.0
    %800 = vmatpush1.msra.mxu0 %v593
    %801 = vmatprep.subr.mxu0 0.0
    %802 = vmatpush1.msra.mxu0 %v594
    %803 = vmatprep.subr.mxu0 0.0
    %804 = vmatpush1.msra.mxu0 %v595
    %805 = vmatprep.subr.mxu0 0.0
    %806 = vmatpush1.msra.mxu0 %v596
    %807 = vmatprep.subr.mxu0 0.0
    %808 = vmatpush1.msra.mxu0 %v597
    %809 = vmatprep.subr.mxu0 0.0
    %810 = vmatpush1.msra.mxu0 %v598
    %811 = vmatprep.subr.mxu0 0.0
    %812 = vmatpush1.msra.mxu0 %v599
    %813 = vmatprep.subr.mxu0 0.0
    %814 = vmatpush1.msra.mxu0 %v600
    %815 = vmatprep.subr.mxu0 0.0
    %816 = vmatpush1.msra.mxu0 %v601
    %817 = vmatprep.subr.mxu0 0.0
    %818 = vmatpush1.msra.mxu0 %v602
    %819 = vmatprep.subr.mxu0 0.0
    %820 = vmatpush1.msra.mxu0 %v603
    %821 = vmatprep.subr.mxu0 0.0
    %822 = vmatpush1.msra.mxu0 %v604
    %823 = vmatprep.subr.mxu0 0.0
    %824 = vmatpush1.msra.mxu0 %v605
    %825 = vmatprep.subr.mxu0 0.0
    %826 = vmatpush1.msra.mxu0 %v606
    %827 = vmatprep.subr.mxu0 0.0
    %828 = vmatpush1.msra.mxu0 %v607
    %829 = vmatprep.subr.mxu0 0.0
    %830 = vmatpush1.msra.mxu0 %v608
    %831 = vmatprep.subr.mxu0 0.0
    %832 = vmatpush1.msra.mxu0 %v609
    %833 = vmatprep.subr.mxu0 0.0
    %834 = vmatpush1.msra.mxu0 %v610
    %835 = vmatprep.subr.mxu0 0.0
    %836 = vmatpush1.msra.mxu0 %v611
    %837 = vmatprep.subr.mxu0 0.0
    %838 = vmatpush1.msra.mxu0 %v612
    %839 = vmatprep.subr.mxu0 0.0
    %840 = vmatpush1.msra.mxu0 %v613
    %841 = vmatprep.subr.mxu0 0.0
    %842 = vmatpush1.msra.mxu0 %v614
    %843 = vmatprep.subr.mxu0 0.0
    %844 = vmatpush1.msra.mxu0 %v615
    %845 = vmatprep.subr.mxu0 0.0
    %846 = vmatpush1.msra.mxu0 %v616
    %847 = vmatprep.subr.mxu0 0.0
    %848 = vmatpush1.msra.mxu0 %v617
    %849 = vmatprep.mubr.f32.mxu0 %v575
    %850 = vmatmul.mubr.f32.gmra.mrb[0].mxu0 %v574
    %v851 = vpop.f32.mrb[0].mxu0
    %v852 = vadd.f32 %v783, %v851
    %v853 = vpop.f32.mrb[0].mxu0
    %854 = vdwg.mxu0
    %855 = vmatprep.subr.mxu0 0.0
    %856 = vmatpush1.msra.mxu0 %v618
    %857 = vmatprep.subr.mxu0 0.0
    %858 = vmatpush1.msra.mxu0 %v619
    %859 = vmatprep.subr.mxu0 0.0
    %860 = vmatpush1.msra.mxu0 %v620
    %861 = vmatprep.subr.mxu0 0.0
    %862 = vmatpush1.msra.mxu0 %v621
    %863 = vmatprep.subr.mxu0 0.0
    %864 = vmatpush1.msra.mxu0 %v622
    %865 = vmatprep.subr.mxu0 0.0
    %866 = vmatpush1.msra.mxu0 %v623
    %867 = vmatprep.subr.mxu0 0.0
    %868 = vmatpush1.msra.mxu0 %v624
    %869 = vmatprep.subr.mxu0 0.0
    %870 = vmatpush1.msra.mxu0 %v625
    %871 = vmatprep.subr.mxu0 0.0
    %872 = vmatpush1.msra.mxu0 %v626
    %873 = vmatprep.subr.mxu0 0.0
    %874 = vmatpush1.msra.mxu0 %v627
    %875 = vmatprep.subr.mxu0 0.0
    %876 = vmatpush1.msra.mxu0 %v628
    %877 = vmatprep.subr.mxu0 0.0
    %878 = vmatpush1.msra.mxu0 %v629
    %879 = vmatprep.subr.mxu0 0.0
    %880 = vmatpush1.msra.mxu0 %v630
    %881 = vmatprep.subr.mxu0 0.0
    %882 = vmatpush1.msra.mxu0 %v631
    %883 = vmatprep.subr.mxu0 0.0
    %884 = vmatpush1.msra.mxu0 %v632
    %885 = vmatprep.subr.mxu0 0.0
    %886 = vmatpush1.msra.mxu0 %v633
    %887 = vmatprep.subr.mxu0 0.0
    %888 = vmatpush1.msra.mxu0 %v634
    %889 = vmatprep.subr.mxu0 0.0
    %890 = vmatpush1.msra.mxu0 %v635
    %891 = vmatprep.subr.mxu0 0.0
    %892 = vmatpush1.msra.mxu0 %v636
    %893 = vmatprep.subr.mxu0 0.0
    %894 = vmatpush1.msra.mxu0 %v637
    %895 = vmatprep.subr.mxu0 0.0
    %896 = vmatpush1.msra.mxu0 %v638
    %897 = vmatprep.subr.mxu0 0.0
    %898 = vmatpush1.msra.mxu0 %v639
    %899 = vmatprep.subr.mxu0 0.0
    %900 = vmatpush1.msra.mxu0 %v640
    %901 = vmatprep.subr.mxu0 0.0
    %902 = vmatpush1.msra.mxu0 %v641
    %903 = vmatprep.subr.mxu0 0.0
    %904 = vmatpush1.msra.mxu0 %v642
    %905 = vmatprep.subr.mxu0 0.0
    %906 = vmatpush1.msra.mxu0 %v643
    %907 = vmatprep.subr.mxu0 0.0
    %908 = vmatpush1.msra.mxu0 %v644
    %909 = vmatprep.subr.mxu0 0.0
    %910 = vmatpush1.msra.mxu0 %v645
    %911 = vmatprep.subr.mxu0 0.0
    %912 = vmatpush1.msra.mxu0 %v646
    %913 = vmatprep.subr.mxu0 0.0
    %914 = vmatpush1.msra.mxu0 %v647
    %915 = vmatprep.subr.mxu0 0.0
    %916 = vmatpush1.msra.mxu0 %v648
    %917 = vmatprep.subr.mxu0 0.0
    %918 = vmatpush1.msra.mxu0 %v649
    %919 = vmatprep.mubr.f32.mxu0 %v577
    %920 = vmatmul.mubr.f32.gmra.mrb[0].mxu0 %v576
    %v921 = vpop.f32.mrb[0].mxu0
    %v922 = vadd.f32 %v852, %v921
    %v923 = vpop.f32.mrb[0].mxu0
    %924 = vdwg.mxu0
    %925 = vmatprep.subr.mxu0 0.0
    %926 = vmatpush1.msra.mxu0 %v650
    %927 = vmatprep.subr.mxu0 0.0
    %928 = vmatpush1.msra.mxu0 %v651
    %929 = vmatprep.subr.mxu0 0.0
    %930 = vmatpush1.msra.mxu0 %v652
    %931 = vmatprep.subr.mxu0 0.0
    %932 = vmatpush1.msra.mxu0 %v653
    %933 = vmatprep.subr.mxu0 0.0
    %934 = vmatpush1.msra.mxu0 %v654
    %935 = vmatprep.subr.mxu0 0.0
    %936 = vmatpush1.msra.mxu0 %v655
    %937 = vmatprep.subr.mxu0 0.0
    %938 = vmatpush1.msra.mxu0 %v656
    %939 = vmatprep.subr.mxu0 0.0
    %940 = vmatpush1.msra.mxu0 %v657
    %941 = vmatprep.subr.mxu0 0.0
    %942 = vmatpush1.msra.mxu0 %v658
    %943 = vmatprep.subr.mxu0 0.0
    %944 = vmatpush1.msra.mxu0 %v659
    %945 = vmatprep.subr.mxu0 0.0
    %946 = vmatpush1.msra.mxu0 %v660
    %947 = vmatprep.subr.mxu0 0.0
    %948 = vmatpush1.msra.mxu0 %v661
    %949 = vmatprep.subr.mxu0 0.0
    %950 = vmatpush1.msra.mxu0 %v662
    %951 = vmatprep.subr.mxu0 0.0
    %952 = vmatpush1.msra.mxu0 %v663
    %953 = vmatprep.subr.mxu0 0.0
    %954 = vmatpush1.msra.mxu0 %v664
    %955 = vmatprep.subr.mxu0 0.0
    %956 = vmatpush1.msra.mxu0 %v665
    %957 = vmatprep.subr.mxu0 0.0
    %958 = vmatpush1.msra.mxu0 %v666
    %959 = vmatprep.subr.mxu0 0.0
    %960 = vmatpush1.msra.mxu0 %v667
    %961 = vmatprep.subr.mxu0 0.0
    %962 = vmatpush1.msra.mxu0 %v668
    %963 = vmatprep.subr.mxu0 0.0
    %964 = vmatpush1.msra.mxu0 %v669
    %965 = vmatprep.subr.mxu0 0.0
    %966 = vmatpush1.msra.mxu0 %v670
    %967 = vmatprep.subr.mxu0 0.0
    %968 = vmatpush1.msra.mxu0 %v671
    %969 = vmatprep.subr.mxu0 0.0
    %970 = vmatpush1.msra.mxu0 %v672
    %971 = vmatprep.subr.mxu0 0.0
    %972 = vmatpush1.msra.mxu0 %v673
    %973 = vmatprep.subr.mxu0 0.0
    %974 = vmatpush1.msra.mxu0 %v674
    %975 = vmatprep.subr.mxu0 0.0
    %976 = vmatpush1.msra.mxu0 %v675
    %977 = vmatprep.subr.mxu0 0.0
    %978 = vmatpush1.msra.mxu0 %v676
    %979 = vmatprep.subr.mxu0 0.0
    %980 = vmatpush1.msra.mxu0 %v677
    %981 = vmatprep.subr.mxu0 0.0
    %982 = vmatpush1.msra.mxu0 %v678
    %983 = vmatprep.subr.mxu0 0.0
    %984 = vmatpush1.msra.mxu0 %v679
    %985 = vmatprep.subr.mxu0 0.0
    %986 = vmatpush1.msra.mxu0 %v680
    %987 = vmatprep.subr.mxu0 0.0
    %988 = vmatpush1.msra.mxu0 %v681
    %989 = vmatprep.mubr.f32.mxu0 %v579
    %990 = vmatmul.mubr.f32.gmra.mrb[0].mxu0 %v578
    %v991 = vpop.f32.mrb[0].mxu0
    %v992 = vadd.f32 %v922, %v991
    %v993 = vpop.f32.mrb[0].mxu0
    %994 = vdwg.mxu0
    %995 = vmatprep.subr.mxu0 0.0
    %996 = vmatpush1.msra.mxu0 %v682
    %997 = vmatprep.subr.mxu0 0.0
    %998 = vmatpush1.msra.mxu0 %v683
    %999 = vmatprep.subr.mxu0 0.0
    %1000 = vmatpush1.msra.mxu0 %v684
    %1001 = vmatprep.subr.mxu0 0.0
    %1002 = vmatpush1.msra.mxu0 %v685
    %1003 = vmatprep.subr.mxu0 0.0
    %1004 = vmatpush1.msra.mxu0 %v686
    %1005 = vmatprep.subr.mxu0 0.0
    %1006 = vmatpush1.msra.mxu0 %v687
    %1007 = vmatprep.subr.mxu0 0.0
    %1008 = vmatpush1.msra.mxu0 %v688
    %1009 = vmatprep.subr.mxu0 0.0
    %1010 = vmatpush1.msra.mxu0 %v689
    %1011 = vmatprep.subr.mxu0 0.0
    %1012 = vmatpush1.msra.mxu0 %v690
    %1013 = vmatprep.subr.mxu0 0.0
    %1014 = vmatpush1.msra.mxu0 %v691
    %1015 = vmatprep.subr.mxu0 0.0
    %1016 = vmatpush1.msra.mxu0 %v692
    %1017 = vmatprep.subr.mxu0 0.0
    %1018 = vmatpush1.msra.mxu0 %v693
    %1019 = vmatprep.subr.mxu0 0.0
    %1020 = vmatpush1.msra.mxu0 %v694
    %1021 = vmatprep.subr.mxu0 0.0
    %1022 = vmatpush1.msra.mxu0 %v695
    %1023 = vmatprep.subr.mxu0 0.0
    %1024 = vmatpush1.msra.mxu0 %v696
    %1025 = vmatprep.subr.mxu0 0.0
    %1026 = vmatpush1.msra.mxu0 %v697
    %1027 = vmatprep.subr.mxu0 0.0
    %1028 = vmatpush1.msra.mxu0 %v698
    %1029 = vmatprep.subr.mxu0 0.0
    %1030 = vmatpush1.msra.mxu0 %v699
    %1031 = vmatprep.subr.mxu0 0.0
    %1032 = vmatpush1.msra.mxu0 %v700
    %1033 = vmatprep.subr.mxu0 0.0
    %1034 = vmatpush1.msra.mxu0 %v701
    %1035 = vmatprep.subr.mxu0 0.0
    %1036 = vmatpush1.msra.mxu0 %v702
    %1037 = vmatprep.subr.mxu0 0.0
    %1038 = vmatpush1.msra.mxu0 %v703
    %1039 = vmatprep.subr.mxu0 0.0
    %1040 = vmatpush1.msra.mxu0 %v704
    %1041 = vmatprep.subr.mxu0 0.0
    %1042 = vmatpush1.msra.mxu0 %v705
    %1043 = vmatprep.subr.mxu0 0.0
    %1044 = vmatpush1.msra.mxu0 %v706
    %1045 = vmatprep.subr.mxu0 0.0
    %1046 = vmatpush1.msra.mxu0 %v707
    %1047 = vmatprep.subr.mxu0 0.0
    %1048 = vmatpush1.msra.mxu0 %v708
    %1049 = vmatprep.subr.mxu0 0.0
    %1050 = vmatpush1.msra.mxu0 %v709
    %1051 = vmatprep.subr.mxu0 0.0
    %1052 = vmatpush1.msra.mxu0 %v710
    %1053 = vmatprep.subr.mxu0 0.0
    %1054 = vmatpush1.msra.mxu0 %v711
    %1055 = vmatprep.subr.mxu0 0.0
    %1056 = vmatpush1.msra.mxu0 %v712
    %1057 = vmatprep.subr.mxu0 0.0
    %1058 = vmatpush1.msra.mxu0 %v713
    %1059 = vmatprep.mubr.f32.mxu0 %v581
    %1060 = vmatmul.mubr.f32.gmra.mrb[0].mxu0 %v580
    %v1061 = vpop.f32.mrb[0].mxu0
    %v1062 = vadd.f32 %v992, %v1061
    %v1063 = vpop.f32.mrb[0].mxu0
    %1064 = vdwg.mxu0
    %1065 = vmatprep.subr.mxu0 0.0
    %1066 = vmatpush1.msra.mxu0 %v714
    %1067 = vmatprep.subr.mxu0 0.0
    %1068 = vmatpush1.msra.mxu0 %v715
    %1069 = vmatprep.subr.mxu0 0.0
    %1070 = vmatpush1.msra.mxu0 %v716
    %1071 = vmatprep.subr.mxu0 0.0
    %1072 = vmatpush1.msra.mxu0 %v717
    %1073 = vmatprep.subr.mxu0 0.0
    %1074 = vmatpush1.msra.mxu0 %v718
    %1075 = vmatprep.subr.mxu0 0.0
    %1076 = vmatpush1.msra.mxu0 %v719
    %1077 = vmatprep.subr.mxu0 0.0
    %1078 = vmatpush1.msra.mxu0 %v720
    %1079 = vmatprep.subr.mxu0 0.0
    %1080 = vmatpush1.msra.mxu0 %v721
    %1081 = vmatprep.subr.mxu0 0.0
    %1082 = vmatpush1.msra.mxu0 %v722
    %1083 = vmatprep.subr.mxu0 0.0
    %1084 = vmatpush1.msra.mxu0 %v723
    %1085 = vmatprep.subr.mxu0 0.0
    %1086 = vmatpush1.msra.mxu0 %v724
    %1087 = vmatprep.subr.mxu0 0.0
    %1088 = vmatpush1.msra.mxu0 %v725
    %1089 = vmatprep.subr.mxu0 0.0
    %1090 = vmatpush1.msra.mxu0 %v726
    %1091 = vmatprep.subr.mxu0 0.0
    %1092 = vmatpush1.msra.mxu0 %v727
    %1093 = vmatprep.subr.mxu0 0.0
    %1094 = vmatpush1.msra.mxu0 %v728
    %1095 = vmatprep.subr.mxu0 0.0
    %1096 = vmatpush1.msra.mxu0 %v729
    %1097 = vmatprep.subr.mxu0 0.0
    %1098 = vmatpush1.msra.mxu0 %v730
    %1099 = vmatprep.subr.mxu0 0.0
    %1100 = vmatpush1.msra.mxu0 %v731
    %1101 = vmatprep.subr.mxu0 0.0
    %1102 = vmatpush1.msra.mxu0 %v732
    %1103 = vmatprep.subr.mxu0 0.0
    %1104 = vmatpush1.msra.mxu0 %v733
    %1105 = vmatprep.subr.mxu0 0.0
    %1106 = vmatpush1.msra.mxu0 %v734
    %1107 = vmatprep.subr.mxu0 0.0
    %1108 = vmatpush1.msra.mxu0 %v735
    %1109 = vmatprep.subr.mxu0 0.0
    %1110 = vmatpush1.msra.mxu0 %v736
    %1111 = vmatprep.subr.mxu0 0.0
    %1112 = vmatpush1.msra.mxu0 %v737
    %1113 = vmatprep.subr.mxu0 0.0
    %1114 = vmatpush1.msra.mxu0 %v738
    %1115 = vmatprep.subr.mxu0 0.0
    %1116 = vmatpush1.msra.mxu0 %v739
    %1117 = vmatprep.subr.mxu0 0.0
    %1118 = vmatpush1.msra.mxu0 %v740
    %1119 = vmatprep.subr.mxu0 0.0
    %1120 = vmatpush1.msra.mxu0 %v741
    %1121 = vmatprep.subr.mxu0 0.0
    %1122 = vmatpush1.msra.mxu0 %v742
    %1123 = vmatprep.subr.mxu0 0.0
    %1124 = vmatpush1.msra.mxu0 %v743
    %1125 = vmatprep.subr.mxu0 0.0
    %1126 = vmatpush1.msra.mxu0 %v744
    %1127 = vmatprep.subr.mxu0 0.0
    %1128 = vmatpush1.msra.mxu0 %v745
    %1129 = vmatprep.mubr.f32.mxu0 %v583
    %1130 = vmatmul.mubr.f32.gmra.mrb[0].mxu0 %v582
    %v1131 = vpop.f32.mrb[0].mxu0
    %v1132 = vadd.f32 %v1062, %v1131
    %v1133 = vpop.f32.mrb[0].mxu0
    %1134 = vdwg.mxu0
    %1135 = vmatprep.subr.mxu0 0.0
    %1136 = vmatpush1.msra.mxu0 %v746
    %1137 = vmatprep.subr.mxu0 0.0
    %1138 = vmatpush1.msra.mxu0 %v747
    %1139 = vmatprep.subr.mxu0 0.0
    %1140 = vmatpush1.msra.mxu0 %v748
    %1141 = vmatprep.subr.mxu0 0.0
    %1142 = vmatpush1.msra.mxu0 %v749
    %1143 = vmatprep.subr.mxu0 0.0
    %1144 = vmatpush1.msra.mxu0 %v750
    %1145 = vmatprep.subr.mxu0 0.0
    %1146 = vmatpush1.msra.mxu0 %v751
    %1147 = vmatprep.subr.mxu0 0.0
    %1148 = vmatpush1.msra.mxu0 %v752
    %1149 = vmatprep.subr.mxu0 0.0
    %1150 = vmatpush1.msra.mxu0 %v753
    %1151 = vmatprep.subr.mxu0 0.0
    %1152 = vmatpush1.msra.mxu0 %v754
    %1153 = vmatprep.subr.mxu0 0.0
    %1154 = vmatpush1.msra.mxu0 %v755
    %1155 = vmatprep.subr.mxu0 0.0
    %1156 = vmatpush1.msra.mxu0 %v756
    %1157 = vmatprep.subr.mxu0 0.0
    %1158 = vmatpush1.msra.mxu0 %v757
    %1159 = vmatprep.subr.mxu0 0.0
    %1160 = vmatpush1.msra.mxu0 %v758
    %1161 = vmatprep.subr.mxu0 0.0
    %1162 = vmatpush1.msra.mxu0 %v759
    %1163 = vmatprep.subr.mxu0 0.0
    %1164 = vmatpush1.msra.mxu0 %v760
    %1165 = vmatprep.subr.mxu0 0.0
    %1166 = vmatpush1.msra.mxu0 %v761
    %1167 = vmatprep.subr.mxu0 0.0
    %1168 = vmatpush1.msra.mxu0 %v762
    %1169 = vmatprep.subr.mxu0 0.0
    %1170 = vmatpush1.msra.mxu0 %v763
    %1171 = vmatprep.subr.mxu0 0.0
    %1172 = vmatpush1.msra.mxu0 %v764
    %1173 = vmatprep.subr.mxu0 0.0
    %1174 = vmatpush1.msra.mxu0 %v765
    %1175 = vmatprep.subr.mxu0 0.0
    %1176 = vmatpush1.msra.mxu0 %v766
    %1177 = vmatprep.subr.mxu0 0.0
    %1178 = vmatpush1.msra.mxu0 %v767
    %1179 = vmatprep.subr.mxu0 0.0
    %1180 = vmatpush1.msra.mxu0 %v768
    %1181 = vmatprep.subr.mxu0 0.0
    %1182 = vmatpush1.msra.mxu0 %v769
    %1183 = vmatprep.subr.mxu0 0.0
    %1184 = vmatpush1.msra.mxu0 %v770
    %1185 = vmatprep.subr.mxu0 0.0
    %1186 = vmatpush1.msra.mxu0 %v771
    %1187 = vmatprep.subr.mxu0 0.0
    %1188 = vmatpush1.msra.mxu0 %v772
    %1189 = vmatprep.subr.mxu0 0.0
    %1190 = vmatpush1.msra.mxu0 %v773
    %1191 = vmatprep.subr.mxu0 0.0
    %1192 = vmatpush1.msra.mxu0 %v774
    %1193 = vmatprep.subr.mxu0 0.0
    %1194 = vmatpush1.msra.mxu0 %v775
    %1195 = vmatprep.subr.mxu0 0.0
    %1196 = vmatpush1.msra.mxu0 %v776
    %1197 = vmatprep.subr.mxu0 0.0
    %1198 = vmatpush1.msra.mxu0 %v777
    %1199 = vmatprep.mubr.f32.mxu0 %v585
    %1200 = vmatmul.mubr.f32.gmra.mrb[0].mxu0 %v584
    %v1201 = vpop.f32.mrb[0].mxu0
    %v1202 = vadd.f32 %v1132, %v1201
    %v1203 = vpop.f32.mrb[0].mxu0
    %1204 = vdwg.mxu0
    %v1205 = vsub.f32 0.0, %v1202
    %v1206 = vmul.f32 %v1205, 1.442695
    %v1207 = vpow.pop %v1206
    %v1208 = vadd.f32 %v1207, 1.0
    %v1209 = vrcp.pop %v1208
    %1210 = vst [vmem:[#allocation7] sm:$0xff] %v1209
    // Predicated region
    $region26: #{_ensembles_batched_forward.1} parent=1 // pred_check
      _
    $region27: #{_ensembles_batched_forward.1} parent=1 // pred_check_branch
      %1212 = sbr.rel (0) target = $region29
    $region28: #{_ensembles_batched_forward.1} parent=1 // pred_region
      %s1214 = ssub.s32 128, 128
      %1215 = vsyncadd [#allocation4], %s1214
      %s1217 = sshll.u32 [#allocation7], 4
      %s1218 = int_to_ptr.vmem [resolvable:$true] %s1217
      %1220 = dma.vmem_to_hbm [thread:$0]  %s1218, 128, %s4, [#allocation4]
    $region29: #{_ensembles_batched_forward.1} parent=1 // pred_fallthru
      _
    // Predicated region
    $region30: #{_ensembles_batched_forward.1} parent=1 // pred_check
      _
    $region31: #{_ensembles_batched_forward.1} parent=1 // pred_check_branch
      %1222 = sbr.rel (0) target = $region33
    $region32: #{_ensembles_batched_forward.1} parent=1 // pred_region
      %1223 = dma.done [#allocation4], 128
    $region33: #{_ensembles_batched_forward.1} parent=1 // pred_fallthru
      _
    %1224 = vsyncpa [#allocation3], 1
    %1225 = vsyncpa [#allocation6], 1
    %1226 = vsyncpa [#allocation4], 1

</llo_original>
